<compile_context>
chip_gen: v6e
topology: v6e:2x2x1
jax: 0.10.0
libtpu: 0.0.40
codegen_flags: <defaults>
</compile_context>

<pallas_src>
import math

import jax
import jax.numpy as jnp
from jax import lax
from jax.experimental import pallas as pl
from jax.experimental.pallas import tpu as pltpu


# ----------------------------------------------------------------------------
# Exact (erf) GELU, matches torch.nn.GELU() default.
# ----------------------------------------------------------------------------
def _erf_approx(z):
    """Abramowitz & Stegun 7.1.26 erf approximation, |error| <= 1.5e-7."""
    a1 = 0.254829592
    a2 = -0.284496736
    a3 = 1.421413741
    a4 = -1.453152027
    a5 = 1.061405429
    p = 0.3275911
    az = jnp.abs(z)
    t = 1.0 / (1.0 + p * az)          # exact divide: VALU is not the bottleneck
    poly = ((((a5 * t + a4) * t + a3) * t + a2) * t + a1) * t
    y = 1.0 - poly * jnp.exp(-az * az)
    return jnp.where(z < 0.0, -y, y)


def _gelu_exact(x):
    # 0.5 * x * (1 + erf(x / sqrt(2)))
    return 0.5 * x * (1.0 + _erf_approx(x * (1.0 / math.sqrt(2.0))))


# Contract dim 1 of both operands: (m, k) x (n, k) -> (m, n)  == A @ B.T
_DN_RHS_T = (((1,), (1,)), ((), ()))


# ----------------------------------------------------------------------------
# Kernels
# ----------------------------------------------------------------------------
def _ffn_fused_kernel(x_ref, w1_ref, b1_ref, w2_ref, b2_ref, o_ref):
    """Weights fully resident; one grid axis over row tiles."""
    x = x_ref[...]                                                  # (tm, D)
    h = lax.dot_general(x, w1_ref[...], _DN_RHS_T,
                        preferred_element_type=jnp.float32)         # (tm, H)
    h = _gelu_exact(h + b1_ref[...])                                 # f32 GELU
    h = h.astype(x_ref.dtype)          # bf16 MXU operands for bf16 in; no-op f32
    out = lax.dot_general(h, w2_ref[...], _DN_RHS_T,
                          preferred_element_type=jnp.float32)        # (tm, D)
    o_ref[...] = (out + b2_ref[...]).astype(o_ref.dtype)
    # TODO(synk): Dropout (p=0.0) is identity at inference and is omitted.


def _ffn_stream_kernel(x_ref, w1_ref, b1_ref, w2_ref, b2_ref, o_ref, acc_ref):
    """Streams H in tiles (grid axis 1, 'arbitrary'); f32 accumulator scratch."""
    hi = pl.program_id(1)

    @pl.when(hi == 0)
    def _():
        acc_ref[...] = jnp.zeros_like(acc_ref)

    x = x_ref[...]                                                  # (tm, D)
    h = lax.dot_general(x, w1_ref[...], _DN_RHS_T,
                        preferred_element_type=jnp.float32)          # (tm, th)
    h = _gelu_exact(h + b1_ref[...])
    h = h.astype(x_ref.dtype)
    acc_ref[...] += lax.dot_general(h, w2_ref[...], _DN_RHS_T,
                                    preferred_element_type=jnp.float32)

    @pl.when(hi == pl.num_programs(1) - 1)
    def _():
        o_ref[...] = (acc_ref[...] + b2_ref[...]).astype(o_ref.dtype)
    # TODO(synk): Dropout (p=0.0) is identity at inference and is omitted.


# ----------------------------------------------------------------------------
# Wrapper
# ----------------------------------------------------------------------------
def _vmem_limit_bytes():
    try:
        cap = int(pltpu.get_tpu_info().vmem_capacity_bytes)
    except Exception:
        cap = 128 << 20
    # ~96 MiB on v5e/v6e (128 MiB physical), ~48 MiB on v7x (64 MiB per TC).
    return min(100 << 20, (cap * 3) // 4)


def _choose_tm(M, block_rows):
    if M <= 256:
        return M
    # >= 2 grid steps so both v7x TensorCores get work; 256-aligned tiles.
    half = -(-M // 2)
    return min(block_rows, ((half + 255) // 256) * 256, M)


def _choose_th(H, hidden_block, weight_bytes, vmem_budget):
    if hidden_block is not None:
        return hidden_block if (hidden_block < H and H % hidden_block == 0) else None
    if weight_bytes <= vmem_budget // 3:
        return None                      # weights comfortably resident -> fused path
    for th in (1024, 512, 256, 128):
        if th < H and H % th == 0:
            return th
    return None


def feedforward_forward(x, w1, b1, w2, b2, *, block_rows=512, hidden_block=None):
    """FeedForward: GELU(x @ w1.T + b1) @ w2.T + b2  (dropout p=0.0 omitted).

    x: (..., D); w1: (H, D); b1: (H,); w2: (D, H); b2: (D,)  [nn.Linear layouts].
    """
    orig_shape = x.shape
    D = orig_shape[-1]
    H = w1.shape[0]
    assert w1.shape == (H, D) and w2.shape == (D, H)
    assert b1.shape == (H,) and b2.shape == (D,)

    M = math.prod(orig_shape[:-1])
    x2 = x.reshape(M, D)
    b1r = b1.reshape(1, H)
    b2r = b2.reshape(1, D)

    tm = _choose_tm(M, block_rows)
    vmem_limit = _vmem_limit_bytes()
    wbytes = 2 * D * H * w1.dtype.itemsize
    th = _choose_th(H, hidden_block, wbytes, vmem_limit)

    cost = pl.CostEstimate(
        flops=4 * M * D * H,
        transcendentals=M * H,
        bytes_accessed=2 * M * D * x.dtype.itemsize
        + wbytes
        + (H + D) * b1.dtype.itemsize,
    )

    if th is None:
        # ---- fused path: weights resident, 1-D grid over row tiles ----------
        grid = (pl.cdiv(M, tm),)
        dim_sem = ("parallel",)
        kernel = _ffn_fused_kernel
        scratch = ()
        out_spec = pl.BlockSpec((tm, D), lambda i: (i, 0))

        def make_in_specs(buffered):
            pm = dict(pipeline_mode=pl.Buffered(1)) if buffered else {}
            return [
                pl.BlockSpec((tm, D), lambda i: (i, 0)),            # x rows
                pl.BlockSpec((H, D), lambda i: (0, 0), **pm),       # W1 (resident)
                pl.BlockSpec((1, H), lambda i: (0, 0), **pm),       # b1
                pl.BlockSpec((D, H), lambda i: (0, 0), **pm),       # W2 (resident)
                pl.BlockSpec((1, D), lambda i: (0, 0), **pm),       # b2
            ]
    else:
        # ---- H-streaming path: 2-D grid (rows, H tiles), accumulator --------
        grid = (pl.cdiv(M, tm), H // th)
        dim_sem = ("parallel", "arbitrary")
        kernel = _ffn_stream_kernel
        scratch = (pltpu.VMEM((tm, D), jnp.float32),)
        out_spec = pl.BlockSpec((tm, D), lambda i, h: (i, 0))

        def make_in_specs(buffered):
            pm = dict(pipeline_mode=pl.Buffered(1)) if buffered else {}
            return [
                pl.BlockSpec((tm, D), lambda i, h: (i, 0)),         # x rows
                pl.BlockSpec((th, D), lambda i, h: (h, 0)),         # W1 H-tile
                pl.BlockSpec((1, th), lambda i, h: (0, h)),         # b1 H-tile
                pl.BlockSpec((D, th), lambda i, h: (0, h)),         # W2 H-tile
                pl.BlockSpec((1, D), lambda i, h: (0, 0), **pm),    # b2
            ]

    def run(buffered):
        return pl.pallas_call(
            kernel,
            out_shape=jax.ShapeDtypeStruct((M, D), x.dtype),
            grid=grid,
            in_specs=make_in_specs(buffered),
            out_specs=out_spec,
            scratch_shapes=scratch,
            compiler_params=pltpu.CompilerParams(
                dimension_semantics=dim_sem,
                vmem_limit_bytes=vmem_limit),
            cost_estimate=cost,
        )(x2, w1, b1r, w2, b2r)

    try:
        out = run(True)
    except Exception:
        # pipeline_mode=pl.Buffered(1) unsupported on this jax build -> default.
        out = run(False)

    return out.reshape(orig_shape)


# ----------------------------------------------------------------------------
# Pure-JAX reference (exact-erf GELU, high-precision matmuls).
# ----------------------------------------------------------------------------
def feedforward_ref(x, w1, b1, w2, b2):
    hp = jax.lax.Precision.HIGHEST
    h = jax.nn.gelu(jnp.matmul(x, w1.T, precision=hp) + b1, approximate=False)
    return jnp.matmul(h, w2.T, precision=hp) + b2


if __name__ == "__main__":
    # ---- Test 1: small shapes, fused (resident-weight) path -----------------
    B, N, D, H = 2, 8, 32, 64
    k = jax.random.split(jax.random.PRNGKey(0), 5)
    x = jax.random.normal(k[0], (B, N, D), dtype=jnp.float32)
    w1 = jax.random.normal(k[1], (H, D), dtype=jnp.float32) * (1.0 / math.sqrt(D))
    b1 = jax.random.normal(k[2], (H,), dtype=jnp.float32) * 0.02
    w2 = jax.random.normal(k[3], (D, H), dtype=jnp.float32) * (1.0 / math.sqrt(H))
    b2 = jax.random.normal(k[4], (D,), dtype=jnp.float32) * 0.02

    out = jax.block_until_ready(feedforward_forward(x, w1, b1, w2, b2))
    ref = feedforward_ref(x, w1, b1, w2, b2)
    assert out.shape == (B, N, D)
    assert jnp.allclose(out, ref, atol=2e-5, rtol=2e-5), (
        float(jnp.max(jnp.abs(out - ref))))

    # ---- Test 2: exercise the H-streaming (accumulator) path ----------------
    B2, N2, D2, H2 = 2, 8, 128, 512
    k2 = jax.random.split(jax.random.PRNGKey(1), 5)
    x2 = jax.random.normal(k2[0], (B2, N2, D2), dtype=jnp.float32)
    w1b = jax.random.normal(k2[1], (H2, D2), dtype=jnp.float32) * (1.0 / math.sqrt(D2))
    b1b = jax.random.normal(k2[2], (H2,), dtype=jnp.float32) * 0.02
    w2b = jax.random.normal(k2[3], (D2, H2), dtype=jnp.float32) * (1.0 / math.sqrt(H2))
    b2b = jax.random.normal(k2[4], (D2,), dtype=jnp.float32) * 0.02

    out2 = jax.block_until_ready(
        feedforward_forward(x2, w1b, b1b, w2b, b2b, hidden_block=256))
    ref2 = feedforward_ref(x2, w1b, b1b, w2b, b2b)
    assert out2.shape == (B2, N2, D2)
    assert jnp.allclose(out2, ref2, atol=2e-4, rtol=2e-4), (
        float(jnp.max(jnp.abs(out2 - ref2))))

    print("KERNEL_OK")
</pallas_src>

<mosaic_0001>
module attributes {stable_mosaic.version = 11 : i64} {
  func.func @_ffn_fused_kernel(%arg0: i32, %arg1: memref<16x32xf32, #tpu.memory_space<vmem>>, %arg2: memref<64x32xf32, #tpu.memory_space<vmem>>, %arg3: memref<1x64xf32, #tpu.memory_space<vmem>>, %arg4: memref<32x64xf32, #tpu.memory_space<vmem>>, %arg5: memref<1x32xf32, #tpu.memory_space<vmem>>, %arg6: memref<16x32xf32, #tpu.memory_space<vmem>>) attributes {dimension_semantics = [#tpu.dimension_semantics<parallel>], iteration_bounds = array<i64: 1>, scalar_prefetch = 0 : i64, scratch_operands = 0 : i64, tpu.core_type = #tpu.core_type<tc>, window_params = [{transform_indices = @transform_0, window_bounds = array<i64: 16, 32>}, {pipeline_mode = #tpu.pipeline_mode<synchronous>, transform_indices = @transform_1, window_bounds = array<i64: 64, 32>}, {pipeline_mode = #tpu.pipeline_mode<synchronous>, transform_indices = @transform_2, window_bounds = array<i64: 1, 64>}, {pipeline_mode = #tpu.pipeline_mode<synchronous>, transform_indices = @transform_3, window_bounds = array<i64: 32, 64>}, {pipeline_mode = #tpu.pipeline_mode<synchronous>, transform_indices = @transform_4, window_bounds = array<i64: 1, 32>}, {transform_indices = @transform_5, window_bounds = array<i64: 16, 32>}]} {
    %c0 = arith.constant 0 : index
    %c0_0 = arith.constant 0 : index
    %0 = vector.load %arg1[%c0, %c0_0] : memref<16x32xf32, #tpu.memory_space<vmem>>, vector<16x32xf32>
    %c0_1 = arith.constant 0 : index
    %c0_2 = arith.constant 0 : index
    %1 = vector.load %arg2[%c0_1, %c0_2] : memref<64x32xf32, #tpu.memory_space<vmem>>, vector<64x32xf32>
    %cst = arith.constant dense<0.000000e+00> : vector<16x64xf32>
    %2 = tpu.matmul %0, %1, %cst {dimension_numbers = #tpu.dot_dimension_numbers<[1], [1], [0], [0], [0, 0, 1, 0], [], []>} : vector<16x32xf32>, vector<64x32xf32>, vector<16x64xf32> -> vector<16x64xf32>
    %c0_3 = arith.constant 0 : index
    %c0_4 = arith.constant 0 : index
    %3 = vector.load %arg3[%c0_3, %c0_4] : memref<1x64xf32, #tpu.memory_space<vmem>>, vector<1x64xf32>
    %4 = vector.broadcast %3 : vector<1x64xf32> to vector<16x64xf32>
    %5 = arith.addf %2, %4 : vector<16x64xf32>
    %cst_5 = arith.constant 5.000000e-01 : f32
    %6 = vector.broadcast %cst_5 : f32 to vector<16x64xf32>
    %7 = arith.mulf %6, %5 : vector<16x64xf32>
    %cst_6 = arith.constant 0.707106769 : f32
    %8 = vector.broadcast %cst_6 : f32 to vector<16x64xf32>
    %9 = arith.mulf %5, %8 : vector<16x64xf32>
    %10 = math.absf %9 : vector<16x64xf32>
    %cst_7 = arith.constant 0.327591091 : f32
    %11 = vector.broadcast %cst_7 : f32 to vector<16x64xf32>
    %12 = arith.mulf %11, %10 : vector<16x64xf32>
    %cst_8 = arith.constant 1.000000e+00 : f32
    %13 = vector.broadcast %cst_8 : f32 to vector<16x64xf32>
    %14 = arith.addf %13, %12 : vector<16x64xf32>
    %cst_9 = arith.constant 1.000000e+00 : f32
    %15 = vector.broadcast %cst_9 : f32 to vector<16x64xf32>
    %16 = arith.divf %15, %14 : vector<16x64xf32>
    %cst_10 = arith.constant 1.06140542 : f32
    %17 = vector.broadcast %cst_10 : f32 to vector<16x64xf32>
    %18 = arith.mulf %17, %16 : vector<16x64xf32>
    %cst_11 = arith.constant -1.45315206 : f32
    %19 = vector.broadcast %cst_11 : f32 to vector<16x64xf32>
    %20 = arith.addf %18, %19 : vector<16x64xf32>
    %21 = arith.mulf %20, %16 : vector<16x64xf32>
    %cst_12 = arith.constant 1.42141378 : f32
    %22 = vector.broadcast %cst_12 : f32 to vector<16x64xf32>
    %23 = arith.addf %21, %22 : vector<16x64xf32>
    %24 = arith.mulf %23, %16 : vector<16x64xf32>
    %cst_13 = arith.constant -0.284496725 : f32
    %25 = vector.broadcast %cst_13 : f32 to vector<16x64xf32>
    %26 = arith.addf %24, %25 : vector<16x64xf32>
    %27 = arith.mulf %26, %16 : vector<16x64xf32>
    %cst_14 = arith.constant 0.254829586 : f32
    %28 = vector.broadcast %cst_14 : f32 to vector<16x64xf32>
    %29 = arith.addf %27, %28 : vector<16x64xf32>
    %30 = arith.mulf %29, %16 : vector<16x64xf32>
    %cst_15 = arith.constant 0.000000e+00 : f32
    %31 = vector.broadcast %cst_15 : f32 to vector<16x64xf32>
    %32 = arith.subf %31, %10 : vector<16x64xf32>
    %33 = arith.mulf %32, %10 : vector<16x64xf32>
    %34 = math.exp %33 : vector<16x64xf32>
    %35 = arith.mulf %30, %34 : vector<16x64xf32>
    %cst_16 = arith.constant 1.000000e+00 : f32
    %36 = vector.broadcast %cst_16 : f32 to vector<16x64xf32>
    %37 = arith.subf %36, %35 : vector<16x64xf32>
    %cst_17 = arith.constant 0.000000e+00 : f32
    %38 = vector.broadcast %cst_17 : f32 to vector<16x64xf32>
    %39 = arith.cmpf olt, %9, %38 : vector<16x64xf32>
    %cst_18 = arith.constant 0.000000e+00 : f32
    %40 = vector.broadcast %cst_18 : f32 to vector<16x64xf32>
    %41 = arith.subf %40, %37 : vector<16x64xf32>
    %42 = arith.select %39, %41, %37 : vector<16x64xi1>, vector<16x64xf32>
    %cst_19 = arith.constant 1.000000e+00 : f32
    %43 = vector.broadcast %cst_19 : f32 to vector<16x64xf32>
    %44 = arith.addf %43, %42 : vector<16x64xf32>
    %45 = arith.mulf %7, %44 : vector<16x64xf32>
    %c0_20 = arith.constant 0 : index
    %c0_21 = arith.constant 0 : index
    %46 = vector.load %arg4[%c0_20, %c0_21] : memref<32x64xf32, #tpu.memory_space<vmem>>, vector<32x64xf32>
    %cst_22 = arith.constant dense<0.000000e+00> : vector<16x32xf32>
    %47 = tpu.matmul %45, %46, %cst_22 {dimension_numbers = #tpu.dot_dimension_numbers<[1], [1], [0], [0], [0, 0, 1, 0], [], []>} : vector<16x64xf32>, vector<32x64xf32>, vector<16x32xf32> -> vector<16x32xf32>
    %c0_23 = arith.constant 0 : index
    %c0_24 = arith.constant 0 : index
    %48 = vector.load %arg5[%c0_23, %c0_24] : memref<1x32xf32, #tpu.memory_space<vmem>>, vector<1x32xf32>
    %49 = vector.broadcast %48 : vector<1x32xf32> to vector<16x32xf32>
    %50 = arith.addf %47, %49 : vector<16x32xf32>
    %c0_25 = arith.constant 0 : index
    %c0_26 = arith.constant 0 : index
    %51 = vector.load %arg6[%c0_25, %c0_26] : memref<16x32xf32, #tpu.memory_space<vmem>>, vector<16x32xf32>
    tpu.vector_store %arg6[%c0_25, %c0_26], %50 {strides = array<i32>} : memref<16x32xf32, #tpu.memory_space<vmem>>, vector<16x32xf32>,
    return
  }
  func.func @transform_0(%arg0: i32) -> (i32, i32) {
    %c0_i32 = arith.constant 0 : i32
    %c0_i32_0 = arith.constant 0 : i32
    return %arg0, %c0_i32 : i32, i32
  }
  func.func @transform_1(%arg0: i32) -> (i32, i32) {
    %c0_i32 = arith.constant 0 : i32
    %c0_i32_0 = arith.constant 0 : i32
    %c0_i32_1 = arith.constant 0 : i32
    return %c0_i32, %c0_i32_0 : i32, i32
  }
  func.func @transform_2(%arg0: i32) -> (i32, i32) {
    %c0_i32 = arith.constant 0 : i32
    %c0_i32_0 = arith.constant 0 : i32
    %c0_i32_1 = arith.constant 0 : i32
    return %c0_i32, %c0_i32_0 : i32, i32
  }
  func.func @transform_3(%arg0: i32) -> (i32, i32) {
    %c0_i32 = arith.constant 0 : i32
    %c0_i32_0 = arith.constant 0 : i32
    %c0_i32_1 = arith.constant 0 : i32
    return %c0_i32, %c0_i32_0 : i32, i32
  }
  func.func @transform_4(%arg0: i32) -> (i32, i32) {
    %c0_i32 = arith.constant 0 : i32
    %c0_i32_0 = arith.constant 0 : i32
    %c0_i32_1 = arith.constant 0 : i32
    return %c0_i32, %c0_i32_0 : i32, i32
  }
  func.func @transform_5(%arg0: i32) -> (i32, i32) {
    %c0_i32 = arith.constant 0 : i32
    %c0_i32_0 = arith.constant 0 : i32
    return %arg0, %c0_i32 : i32, i32
  }
}

module attributes {stable_mosaic.version = 11 : i64} {
  func.func @_ffn_fused_kernel(%arg0: i32, %arg1: memref<16x32xf32, #tpu.memory_space<vmem>>, %arg2: memref<64x32xf32, #tpu.memory_space<vmem>>, %arg3: memref<1x64xf32, #tpu.memory_space<vmem>>, %arg4: memref<32x64xf32, #tpu.memory_space<vmem>>, %arg5: memref<1x32xf32, #tpu.memory_space<vmem>>, %arg6: memref<16x32xf32, #tpu.memory_space<vmem>>) attributes {dimension_semantics = [#tpu.dimension_semantics<parallel>], iteration_bounds = array<i64: 1>, scalar_prefetch = 0 : i64, scratch_operands = 0 : i64, tpu.core_type = #tpu.core_type<tc>, window_params = [{transform_indices = @transform_0, window_bounds = array<i64: 16, 32>}, {pipeline_mode = #tpu.pipeline_mode<synchronous>, transform_indices = @transform_1, window_bounds = array<i64: 64, 32>}, {pipeline_mode = #tpu.pipeline_mode<synchronous>, transform_indices = @transform_2, window_bounds = array<i64: 1, 64>}, {pipeline_mode = #tpu.pipeline_mode<synchronous>, transform_indices = @transform_3, window_bounds = array<i64: 32, 64>}, {pipeline_mode = #tpu.pipeline_mode<synchronous>, transform_indices = @transform_4, window_bounds = array<i64: 1, 32>}, {transform_indices = @transform_5, window_bounds = array<i64: 16, 32>}]} {
    %c0 = arith.constant 0 : index
    %c0_0 = arith.constant 0 : index
    %0 = vector.load %arg1[%c0, %c0_0] : memref<16x32xf32, #tpu.memory_space<vmem>>, vector<16x32xf32>
    %c0_1 = arith.constant 0 : index
    %c0_2 = arith.constant 0 : index
    %1 = vector.load %arg2[%c0_1, %c0_2] : memref<64x32xf32, #tpu.memory_space<vmem>>, vector<64x32xf32>
    %cst = arith.constant dense<0.000000e+00> : vector<16x64xf32>
    %2 = tpu.matmul %0, %1, %cst {dimension_numbers = #tpu.dot_dimension_numbers<[1], [1], [0], [0], [0, 0, 1, 0], [], []>} : vector<16x32xf32>, vector<64x32xf32>, vector<16x64xf32> -> vector<16x64xf32>
    %c0_3 = arith.constant 0 : index
    %c0_4 = arith.constant 0 : index
    %3 = vector.load %arg3[%c0_3, %c0_4] : memref<1x64xf32, #tpu.memory_space<vmem>>, vector<1x64xf32>
    %4 = vector.broadcast %3 : vector<1x64xf32> to vector<16x64xf32>
    %5 = arith.addf %2, %4 : vector<16x64xf32>
    %cst_5 = arith.constant 5.000000e-01 : f32
    %6 = vector.broadcast %cst_5 : f32 to vector<16x64xf32>
    %7 = arith.mulf %6, %5 : vector<16x64xf32>
    %cst_6 = arith.constant 0.707106769 : f32
    %8 = vector.broadcast %cst_6 : f32 to vector<16x64xf32>
    %9 = arith.mulf %5, %8 : vector<16x64xf32>
    %10 = math.absf %9 : vector<16x64xf32>
    %cst_7 = arith.constant 0.327591091 : f32
    %11 = vector.broadcast %cst_7 : f32 to vector<16x64xf32>
    %12 = arith.mulf %11, %10 : vector<16x64xf32>
    %cst_8 = arith.constant 1.000000e+00 : f32
    %13 = vector.broadcast %cst_8 : f32 to vector<16x64xf32>
    %14 = arith.addf %13, %12 : vector<16x64xf32>
    %cst_9 = arith.constant 1.000000e+00 : f32
    %15 = vector.broadcast %cst_9 : f32 to vector<16x64xf32>
    %16 = arith.divf %15, %14 : vector<16x64xf32>
    %cst_10 = arith.constant 1.06140542 : f32
    %17 = vector.broadcast %cst_10 : f32 to vector<16x64xf32>
    %18 = arith.mulf %17, %16 : vector<16x64xf32>
    %cst_11 = arith.constant -1.45315206 : f32
    %19 = vector.broadcast %cst_11 : f32 to vector<16x64xf32>
    %20 = arith.addf %18, %19 : vector<16x64xf32>
    %21 = arith.mulf %20, %16 : vector<16x64xf32>
    %cst_12 = arith.constant 1.42141378 : f32
    %22 = vector.broadcast %cst_12 : f32 to vector<16x64xf32>
    %23 = arith.addf %21, %22 : vector<16x64xf32>
    %24 = arith.mulf %23, %16 : vector<16x64xf32>
    %cst_13 = arith.constant -0.284496725 : f32
    %25 = vector.broadcast %cst_13 : f32 to vector<16x64xf32>
    %26 = arith.addf %24, %25 : vector<16x64xf32>
    %27 = arith.mulf %26, %16 : vector<16x64xf32>
    %cst_14 = arith.constant 0.254829586 : f32
    %28 = vector.broadcast %cst_14 : f32 to vector<16x64xf32>
    %29 = arith.addf %27, %28 : vector<16x64xf32>
    %30 = arith.mulf %29, %16 : vector<16x64xf32>
    %cst_15 = arith.constant 0.000000e+00 : f32
    %31 = vector.broadcast %cst_15 : f32 to vector<16x64xf32>
    %32 = arith.subf %31, %10 : vector<16x64xf32>
    %33 = arith.mulf %32, %10 : vector<16x64xf32>
    %34 = math.exp %33 : vector<16x64xf32>
    %35 = arith.mulf %30, %34 : vector<16x64xf32>
    %cst_16 = arith.constant 1.000000e+00 : f32
    %36 = vector.broadcast %cst_16 : f32 to vector<16x64xf32>
    %37 = arith.subf %36, %35 : vector<16x64xf32>
    %cst_17 = arith.constant 0.000000e+00 : f32
    %38 = vector.broadcast %cst_17 : f32 to vector<16x64xf32>
    %39 = arith.cmpf olt, %9, %38 : vector<16x64xf32>
    %cst_18 = arith.constant 0.000000e+00 : f32
    %40 = vector.broadcast %cst_18 : f32 to vector<16x64xf32>
    %41 = arith.subf %40, %37 : vector<16x64xf32>
    %42 = arith.select %39, %41, %37 : vector<16x64xi1>, vector<16x64xf32>
    %cst_19 = arith.constant 1.000000e+00 : f32
    %43 = vector.broadcast %cst_19 : f32 to vector<16x64xf32>
    %44 = arith.addf %43, %42 : vector<16x64xf32>
    %45 = arith.mulf %7, %44 : vector<16x64xf32>
    %c0_20 = arith.constant 0 : index
    %c0_21 = arith.constant 0 : index
    %46 = vector.load %arg4[%c0_20, %c0_21] : memref<32x64xf32, #tpu.memory_space<vmem>>, vector<32x64xf32>
    %cst_22 = arith.constant dense<0.000000e+00> : vector<16x32xf32>
    %47 = tpu.matmul %45, %46, %cst_22 {dimension_numbers = #tpu.dot_dimension_numbers<[1], [1], [0], [0], [0, 0, 1, 0], [], []>} : vector<16x64xf32>, vector<32x64xf32>, vector<16x32xf32> -> vector<16x32xf32>
    %c0_23 = arith.constant 0 : index
    %c0_24 = arith.constant 0 : index
    %48 = vector.load %arg5[%c0_23, %c0_24] : memref<1x32xf32, #tpu.memory_space<vmem>>, vector<1x32xf32>
    %49 = vector.broadcast %48 : vector<1x32xf32> to vector<16x32xf32>
    %50 = arith.addf %47, %49 : vector<16x32xf32>
    %c0_25 = arith.constant 0 : index
    %c0_26 = arith.constant 0 : index
    %51 = vector.load %arg6[%c0_25, %c0_26] : memref<16x32xf32, #tpu.memory_space<vmem>>, vector<16x32xf32>
    tpu.vector_store %arg6[%c0_25, %c0_26], %50 {strides = array<i32>} : memref<16x32xf32, #tpu.memory_space<vmem>>, vector<16x32xf32>,
    return
  }
  func.func @transform_0(%arg0: i32) -> (i32, i32) {
    %c0_i32 = arith.constant 0 : i32
    %c0_i32_0 = arith.constant 0 : i32
    return %arg0, %c0_i32 : i32, i32
  }
  func.func @transform_1(%arg0: i32) -> (i32, i32) {
    %c0_i32 = arith.constant 0 : i32
    %c0_i32_0 = arith.constant 0 : i32
    %c0_i32_1 = arith.constant 0 : i32
    return %c0_i32, %c0_i32_0 : i32, i32
  }
  func.func @transform_2(%arg0: i32) -> (i32, i32) {
    %c0_i32 = arith.constant 0 : i32
    %c0_i32_0 = arith.constant 0 : i32
    %c0_i32_1 = arith.constant 0 : i32
    return %c0_i32, %c0_i32_0 : i32, i32
  }
  func.func @transform_3(%arg0: i32) -> (i32, i32) {
    %c0_i32 = arith.constant 0 : i32
    %c0_i32_0 = arith.constant 0 : i32
    %c0_i32_1 = arith.constant 0 : i32
    return %c0_i32, %c0_i32_0 : i32, i32
  }
  func.func @transform_4(%arg0: i32) -> (i32, i32) {
    %c0_i32 = arith.constant 0 : i32
    %c0_i32_0 = arith.constant 0 : i32
    %c0_i32_1 = arith.constant 0 : i32
    return %c0_i32, %c0_i32_0 : i32, i32
  }
  func.func @transform_5(%arg0: i32) -> (i32, i32) {
    %c0_i32 = arith.constant 0 : i32
    %c0_i32_0 = arith.constant 0 : i32
    return %arg0, %c0_i32 : i32, i32
  }
}

</mosaic_0001>

<llo_original>
// kernel: tpu_custom_call.1
$region0: #{tpu_custom_call.1}
  #allocation0 [shape = 'u32[]', space=smem, size = 0x4, offset = 0x4, fixed_abs, tag = 'smem constant byte address 0x4 - core index']
  #allocation1 [shape = 'u32[144,128]{1,0:T(1,128)}', space=vmem, size = 0x12000, scoped, tag = 'internal scratch']
  %s0 = inlined_call_operand.vmem [shape: f32[16,32], index: 0, kind: input, shape index: {}]
  %s1 = inlined_call_operand.vmem [shape: f32[64,32], index: 1, kind: input, shape index: {}]
  %s2 = inlined_call_operand.vmem [shape: f32[1,64], index: 2, kind: input, shape index: {}]
  %s3 = inlined_call_operand.vmem [shape: f32[32,64], index: 3, kind: input, shape index: {}]
  %s4 = inlined_call_operand.vmem [shape: f32[1,32], index: 4, kind: input, shape index: {}]
  %s5 = inlined_call_operand.hbm [shape: f32[16,32], index: 5, kind: output, shape index: {}]
  %s6 = sld [smem:[#allocation0]]
  $region30: #{tpu_custom_call.1} parent=0
    _
  %s8 = ssub.s32 1, %s6
  %s9 = scalar_select 0, %s8, %s6
  $region1: #{tpu_custom_call.1} parent=0
    #allocation2 [shape = 'u8[8192]{0}', space=vmem, size = 0x2000, scoped, tag = 'output window, operand 0, single buffered']
    #allocation3 [shape = 's32[1]{0}', space=sflag, size = 0x4, scoped, tag = 'scoped memory for tpu_custom_call.1']
    %10 = vsyncpa [#allocation3], 0
    // Predicated region
    $region2: #{tpu_custom_call.1} parent=1 // pred_check
      _
    $region3: #{tpu_custom_call.1} parent=1 // pred_check_branch
      %12 = sbr.rel (0) target = $region5
    $region4: #{tpu_custom_call.1} parent=1 // pred_region
      _
    $region5: #{tpu_custom_call.1} parent=1 // pred_fallthru
      _
    // Predicated region
    $region6: #{tpu_custom_call.1} parent=1 // pred_check
      _
    $region7: #{tpu_custom_call.1} parent=1 // pred_check_branch
      %14 = sbr.rel (0) target = $region9
    $region8: #{tpu_custom_call.1} parent=1 // pred_region
      _
    $region9: #{tpu_custom_call.1} parent=1 // pred_fallthru
      _
    // Predicated region
    $region10: #{tpu_custom_call.1} parent=1 // pred_check
      _
    $region11: #{tpu_custom_call.1} parent=1 // pred_check_branch
      %16 = sbr.rel (0) target = $region13
    $region12: #{tpu_custom_call.1} parent=1 // pred_region
      _
    $region13: #{tpu_custom_call.1} parent=1 // pred_fallthru
      _
    // Predicated region
    $region14: #{tpu_custom_call.1} parent=1 // pred_check
      _
    $region15: #{tpu_custom_call.1} parent=1 // pred_check_branch
      %18 = sbr.rel (0) target = $region17
    $region16: #{tpu_custom_call.1} parent=1 // pred_region
      _
    $region17: #{tpu_custom_call.1} parent=1 // pred_fallthru
      _
    // Predicated region
    $region18: #{tpu_custom_call.1} parent=1 // pred_check
      _
    $region19: #{tpu_custom_call.1} parent=1 // pred_check_branch
      %20 = sbr.rel (0) target = $region21
    $region20: #{tpu_custom_call.1} parent=1 // pred_region
      _
    $region21: #{tpu_custom_call.1} parent=1 // pred_fallthru
      _
    %v21 = vld [vmem:[%s0] sm:$0xff]
    %v22 = vld [vmem:[%s0 + $0x8] sm:$0xff]
    %v23 = vld [vmem:[%s1] sm:$0xff]
    %v24 = vld [vmem:[%s1 + $0x8] sm:$0xff]
    %v25 = vld [vmem:[%s1 + $0x10] sm:$0xff]
    %v26 = vld [vmem:[%s1 + $0x18] sm:$0xff]
    %v27 = vld [vmem:[%s1 + $0x20] sm:$0xff]
    %v28 = vld [vmem:[%s1 + $0x28] sm:$0xff]
    %v29 = vld [vmem:[%s1 + $0x30] sm:$0xff]
    %v30 = vld [vmem:[%s1 + $0x38] sm:$0xff]
    %v31 = vld [vmem:[%s2] sm:$0x1]
    %v33 = vlaneseq
    %v34 = vshrl.u32 %v33, 7
    %v35 = vsub.s32 0, %v34
    %v36 = vrot.slane %v31, %v35
    %vm38 = vcmask 261120
    %v40 = vsel %vm38, %v21, 0
    %v43 = vsel %vm38, %v22, 0
    %v46 = vsel %vm38, %v23, 0
    %v49 = vsel %vm38, %v24, 0
    %v52 = vsel %vm38, %v25, 0
    %v55 = vsel %vm38, %v26, 0
    %v58 = vsel %vm38, %v27, 0
    %v61 = vsel %vm38, %v28, 0
    %v64 = vsel %vm38, %v29, 0
    %v67 = vsel %vm38, %v30, 0
    %69 = vmatprep.subr.mxu0 0.0
    %70 = vmatpush1.xpose.msra.mxu0 0.0
    %71 = vmatprep.subr.mxu0 0.0
    %72 = vmatpush1.xpose.msra.mxu0 0.0
    %73 = vmatprep.subr.mxu0 0.0
    %74 = vmatpush1.xpose.msra.mxu0 0.0
    %75 = vmatprep.subr.mxu0 0.0
    %76 = vmatpush1.xpose.msra.mxu0 0.0
    %77 = vmatprep.subr.mxu0 0.0
    %78 = vmatpush1.xpose.msra.mxu0 0.0
    %79 = vmatprep.subr.mxu0 0.0
    %80 = vmatpush1.xpose.msra.mxu0 0.0
    %81 = vmatprep.subr.mxu0 0.0
    %82 = vmatpush1.xpose.msra.mxu0 0.0
    %83 = vmatprep.subr.mxu0 0.0
    %84 = vmatpush1.xpose.msra.mxu0 0.0
    %85 = vmatprep.subr.mxu0 0.0
    %86 = vmatpush1.xpose.msra.mxu0 %v67
    %87 = vmatprep.subr.mxu0 0.0
    %88 = vmatpush1.xpose.msra.mxu0 %v64
    %89 = vmatprep.subr.mxu0 0.0
    %90 = vmatpush1.xpose.msra.mxu0 %v61
    %91 = vmatprep.subr.mxu0 0.0
    %92 = vmatpush1.xpose.msra.mxu0 %v58
    %93 = vmatprep.subr.mxu0 0.0
    %94 = vmatpush1.xpose.msra.mxu0 %v55
    %95 = vmatprep.subr.mxu0 0.0
    %96 = vmatpush1.xpose.msra.mxu0 %v52
    %97 = vmatprep.subr.mxu0 0.0
    %98 = vmatpush1.xpose.msra.mxu0 %v49
    %99 = vmatprep.subr.mxu0 0.0
    %100 = vmatpush1.xpose.msra.mxu0 %v46
    %101 = vmatprep.subr.mxu0 0.0
    %102 = vmatpush2.xpose.msra.mxu0 0.0
    %103 = vmatprep.subr.mxu0 0.0
    %104 = vmatpush2.xpose.msra.mxu0 0.0
    %105 = vmatprep.subr.mxu0 0.0
    %106 = vmatpush2.xpose.msra.mxu0 0.0
    %107 = vmatprep.subr.mxu0 0.0
    %108 = vmatpush2.xpose.msra.mxu0 0.0
    %109 = vmatprep.subr.mxu0 0.0
    %110 = vmatpush2.xpose.msra.mxu0 0.0
    %111 = vmatprep.subr.mxu0 0.0
    %112 = vmatpush2.xpose.msra.mxu0 0.0
    %113 = vmatprep.subr.mxu0 0.0
    %114 = vmatpush2.xpose.msra.mxu0 0.0
    %115 = vmatprep.subr.mxu0 0.0
    %116 = vmatpush2.xpose.msra.mxu0 0.0
    %117 = vmatprep.subr.mxu0 0.0
    %118 = vmatpush2.xpose.msra.mxu0 0.0
    %119 = vmatprep.subr.mxu0 0.0
    %120 = vmatpush2.xpose.msra.mxu0 0.0
    %121 = vmatprep.subr.mxu0 0.0
    %122 = vmatpush2.xpose.msra.mxu0 0.0
    %123 = vmatprep.subr.mxu0 0.0
    %124 = vmatpush2.xpose.msra.mxu0 0.0
    %125 = vmatprep.subr.mxu0 0.0
    %126 = vmatpush2.xpose.msra.mxu0 0.0
    %127 = vmatprep.subr.mxu0 0.0
    %128 = vmatpush2.xpose.msra.mxu0 0.0
    %129 = vmatprep.subr.mxu0 0.0
    %130 = vmatpush2.xpose.msra.mxu0 0.0
    %131 = vmatprep.subr.mxu0 0.0
    %132 = vmatpush2.xpose.msra.mxu0 0.0
    %133 = vmatprep.mubr.f32.mxu0 0.0
    %134 = vmatmul.mubr.f32.gmra.mxu0 %v40
    %v135 = vpop.f32.mrf.mxu0
    %v136 = vadd.f32 %v36, %v135
    %v137 = vpop.f32.mrf.mxu0
    %138 = vmatprep.mubr.f32.mxu0 0.0
    %139 = vmatmul.mubr.f32.gmra.mxu0 %v43
    %v140 = vpop.f32.mrf.mxu0
    %v141 = vadd.f32 %v36, %v140
    %v142 = vpop.f32.mrf.mxu0
    %143 = vdwg.mxu0
    %v144 = vmul.f32 %v136, 0.5
    %v145 = vmul.f32 %v141, 0.5
    %v146 = vmul.f32 %v136, 0.70710677
    %v147 = vmul.f32 %v141, 0.70710677
    %v148 = vand.u32 2147483647, %v146
    %v149 = vand.u32 2147483647, %v147
    %v150 = vmul.f32 %v148, 0.3275911
    %v151 = vmul.f32 %v149, 0.3275911
    %v152 = vadd.f32 %v150, 1.0
    %v153 = vadd.f32 %v151, 1.0
    %v154 = vrcp.pop %v152
    %v155 = vmul.f32 1.0, %v154
    %v156 = vrcp.pop %v153
    %v157 = vmul.f32 1.0, %v156
    %v158 = vmul.f32 %v155, 1.0614054
    %v159 = vmul.f32 %v157, 1.0614054
    %v160 = vadd.f32 %v158, -1.4531521
    %v161 = vadd.f32 %v159, -1.4531521
    %v162 = vmul.f32 %v160, %v155
    %v163 = vmul.f32 %v161, %v157
    %v164 = vadd.f32 %v162, 1.4214138
    %v165 = vadd.f32 %v163, 1.4214138
    %v166 = vmul.f32 %v164, %v155
    %v167 = vmul.f32 %v165, %v157
    %v168 = vadd.f32 %v166, -0.28449672
    %v169 = vadd.f32 %v167, -0.28449672
    %v170 = vmul.f32 %v168, %v155
    %v171 = vmul.f32 %v169, %v157
    %v172 = vadd.f32 %v170, 0.2548296
    %v173 = vadd.f32 %v171, 0.2548296
    %v174 = vmul.f32 %v172, %v155
    %v175 = vmul.f32 %v173, %v157
    %v176 = vsub.f32 0.0, %v148
    %v177 = vsub.f32 0.0, %v149
    %v178 = vmul.f32 %v176, %v148
    %v179 = vmul.f32 %v177, %v149
    %v180 = vmul.f32 %v178, 1.442695
    %v181 = vpow.pop %v180
    %v182 = vmul.f32 %v179, 1.442695
    %v183 = vpow.pop %v182
    %v184 = vmul.f32 %v174, %v181
    %v185 = vmul.f32 %v175, %v183
    %v186 = vsub.f32 1.0, %v184
    %v187 = vsub.f32 1.0, %v185
    %vm188 = vcmp.lt.f32.partialorder %v146, 0.0
    %vm189 = vcmp.lt.f32.partialorder %v147, 0.0
    %v190 = vsub.f32 0.0, %v186
    %v191 = vsub.f32 0.0, %v187
    %v192 = vsel %vm188, %v190, %v186
    %v193 = vsel %vm189, %v191, %v187
    %v194 = vadd.f32 %v192, 1.0
    %v195 = vadd.f32 %v193, 1.0
    %v196 = vmul.f32 %v144, %v194
    %v197 = vmul.f32 %v145, %v195
    %v198 = vld [vmem:[%s3] sm:$0xff]
    %v199 = vld [vmem:[%s3 + $0x8] sm:$0xff]
    %v200 = vld [vmem:[%s3 + $0x10] sm:$0xff]
    %v201 = vld [vmem:[%s3 + $0x18] sm:$0xff]
    %v202 = vld [vmem:[%s4] sm:$0x1]
    %v204 = vlaneseq
    %v205 = vshrl.u32 %v204, 7
    %v206 = vsub.s32 0, %v205
    %v207 = vrot.slane %v202, %v206
    %vm209 = vcmask 523264
    %v211 = vsel %vm209, %v196, 0
    %v214 = vsel %vm209, %v197, 0
    %v217 = vsel %vm209, %v198, 0
    %v220 = vsel %vm209, %v199, 0
    %v223 = vsel %vm209, %v200, 0
    %v226 = vsel %vm209, %v201, 0
    %228 = vmatprep.subr.mxu0 0.0
    %229 = vmatpush1.xpose.msra.mxu0 0.0
    %230 = vmatprep.subr.mxu0 0.0
    %231 = vmatpush1.xpose.msra.mxu0 0.0
    %232 = vmatprep.subr.mxu0 0.0
    %233 = vmatpush1.xpose.msra.mxu0 0.0
    %234 = vmatprep.subr.mxu0 0.0
    %235 = vmatpush1.xpose.msra.mxu0 0.0
    %236 = vmatprep.subr.mxu0 0.0
    %237 = vmatpush1.xpose.msra.mxu0 0.0
    %238 = vmatprep.subr.mxu0 0.0
    %239 = vmatpush1.xpose.msra.mxu0 0.0
    %240 = vmatprep.subr.mxu0 0.0
    %241 = vmatpush1.xpose.msra.mxu0 0.0
    %242 = vmatprep.subr.mxu0 0.0
    %243 = vmatpush1.xpose.msra.mxu0 0.0
    %244 = vmatprep.subr.mxu0 0.0
    %245 = vmatpush1.xpose.msra.mxu0 0.0
    %246 = vmatprep.subr.mxu0 0.0
    %247 = vmatpush1.xpose.msra.mxu0 0.0
    %248 = vmatprep.subr.mxu0 0.0
    %249 = vmatpush1.xpose.msra.mxu0 0.0
    %250 = vmatprep.subr.mxu0 0.0
    %251 = vmatpush1.xpose.msra.mxu0 0.0
    %252 = vmatprep.subr.mxu0 0.0
    %253 = vmatpush1.xpose.msra.mxu0 %v226
    %254 = vmatprep.subr.mxu0 0.0
    %255 = vmatpush1.xpose.msra.mxu0 %v223
    %256 = vmatprep.subr.mxu0 0.0
    %257 = vmatpush1.xpose.msra.mxu0 %v220
    %258 = vmatprep.subr.mxu0 0.0
    %259 = vmatpush1.xpose.msra.mxu0 %v217
    %260 = vmatprep.subr.mxu0 0.0
    %261 = vmatpush2.xpose.msra.mxu0 0.0
    %262 = vmatprep.subr.mxu0 0.0
    %263 = vmatpush2.xpose.msra.mxu0 0.0
    %264 = vmatprep.subr.mxu0 0.0
    %265 = vmatpush2.xpose.msra.mxu0 0.0
    %266 = vmatprep.subr.mxu0 0.0
    %267 = vmatpush2.xpose.msra.mxu0 0.0
    %268 = vmatprep.subr.mxu0 0.0
    %269 = vmatpush2.xpose.msra.mxu0 0.0
    %270 = vmatprep.subr.mxu0 0.0
    %271 = vmatpush2.xpose.msra.mxu0 0.0
    %272 = vmatprep.subr.mxu0 0.0
    %273 = vmatpush2.xpose.msra.mxu0 0.0
    %274 = vmatprep.subr.mxu0 0.0
    %275 = vmatpush2.xpose.msra.mxu0 0.0
    %276 = vmatprep.subr.mxu0 0.0
    %277 = vmatpush2.xpose.msra.mxu0 0.0
    %278 = vmatprep.subr.mxu0 0.0
    %279 = vmatpush2.xpose.msra.mxu0 0.0
    %280 = vmatprep.subr.mxu0 0.0
    %281 = vmatpush2.xpose.msra.mxu0 0.0
    %282 = vmatprep.subr.mxu0 0.0
    %283 = vmatpush2.xpose.msra.mxu0 0.0
    %284 = vmatprep.subr.mxu0 0.0
    %285 = vmatpush2.xpose.msra.mxu0 0.0
    %286 = vmatprep.subr.mxu0 0.0
    %287 = vmatpush2.xpose.msra.mxu0 0.0
    %288 = vmatprep.subr.mxu0 0.0
    %289 = vmatpush2.xpose.msra.mxu0 0.0
    %290 = vmatprep.subr.mxu0 0.0
    %291 = vmatpush2.xpose.msra.mxu0 0.0
    %292 = vmatprep.mubr.f32.mxu0 0.0
    %293 = vmatmul.mubr.f32.gmra.mxu0 %v211
    %v294 = vpop.f32.mrf.mxu0
    %v295 = vadd.f32 %v207, %v294
    %v296 = vpop.f32.mrf.mxu0
    %297 = vmatprep.mubr.f32.mxu0 0.0
    %298 = vmatmul.mubr.f32.gmra.mxu0 %v214
    %v299 = vpop.f32.mrf.mxu0
    %v300 = vadd.f32 %v207, %v299
    %v301 = vpop.f32.mrf.mxu0
    %302 = vdwg.mxu0
    %303 = vst.msk [vmem:[#allocation2] sm:$0xff] %vm38, %v295
    %304 = vst.msk [vmem:[#allocation2 + $0x8] sm:$0xff] %vm38, %v300
    // Predicated region
    $region22: #{tpu_custom_call.1} parent=1 // pred_check
      _
    $region23: #{tpu_custom_call.1} parent=1 // pred_check_branch
      %306 = sbr.rel (0) target = $region25
    $region24: #{tpu_custom_call.1} parent=1 // pred_region
      %s308 = ssub.s32 256, 256
      %309 = vsyncadd [#allocation3], %s308
      %s310 = sshll.u32 [#allocation2], 4
      %s311 = int_to_ptr.vmem [resolvable:$true] %s310
      %316 = dma.vmem_to_hbm [thread:$0]  %s311, 256, %s5, [#allocation3], 128, 128, 8
    $region25: #{tpu_custom_call.1} parent=1 // pred_fallthru
      _
    // Predicated region
    $region26: #{tpu_custom_call.1} parent=1 // pred_check
      _
    $region27: #{tpu_custom_call.1} parent=1 // pred_check_branch
      %318 = sbr.rel (0) target = $region29
    $region28: #{tpu_custom_call.1} parent=1 // pred_region
      %319 = dma.done [#allocation3], 256
    $region29: #{tpu_custom_call.1} parent=1 // pred_fallthru
      _
    %320 = vsyncpa [#allocation3], 1

// kernel: tpu_custom_call.1
$region0: #{tpu_custom_call.1}
  #allocation0 [shape = 'u32[]', space=smem, size = 0x4, offset = 0x4, fixed_abs, tag = 'smem constant byte address 0x4 - core index']
  #allocation1 [shape = 'u32[144,128]{1,0:T(1,128)}', space=vmem, size = 0x12000, scoped, tag = 'internal scratch']
  %s0 = inlined_call_operand.vmem [shape: f32[16,32], index: 0, kind: input, shape index: {}]
  %s1 = inlined_call_operand.vmem [shape: f32[64,32], index: 1, kind: input, shape index: {}]
  %s2 = inlined_call_operand.vmem [shape: f32[1,64], index: 2, kind: input, shape index: {}]
  %s3 = inlined_call_operand.vmem [shape: f32[32,64], index: 3, kind: input, shape index: {}]
  %s4 = inlined_call_operand.vmem [shape: f32[1,32], index: 4, kind: input, shape index: {}]
  %s5 = inlined_call_operand.hbm [shape: f32[16,32], index: 5, kind: output, shape index: {}]
  %s6 = sld [smem:[#allocation0]]
  $region30: #{tpu_custom_call.1} parent=0
    _
  %s8 = ssub.s32 1, %s6
  %s9 = scalar_select 0, %s8, %s6
  $region1: #{tpu_custom_call.1} parent=0
    #allocation2 [shape = 'u8[8192]{0}', space=vmem, size = 0x2000, scoped, tag = 'output window, operand 0, single buffered']
    #allocation3 [shape = 's32[1]{0}', space=sflag, size = 0x4, scoped, tag = 'scoped memory for tpu_custom_call.1']
    %10 = vsyncpa [#allocation3], 0
    // Predicated region
    $region2: #{tpu_custom_call.1} parent=1 // pred_check
      _
    $region3: #{tpu_custom_call.1} parent=1 // pred_check_branch
      %12 = sbr.rel (0) target = $region5
    $region4: #{tpu_custom_call.1} parent=1 // pred_region
      _
    $region5: #{tpu_custom_call.1} parent=1 // pred_fallthru
      _
    // Predicated region
    $region6: #{tpu_custom_call.1} parent=1 // pred_check
      _
    $region7: #{tpu_custom_call.1} parent=1 // pred_check_branch
      %14 = sbr.rel (0) target = $region9
    $region8: #{tpu_custom_call.1} parent=1 // pred_region
      _
    $region9: #{tpu_custom_call.1} parent=1 // pred_fallthru
      _
    // Predicated region
    $region10: #{tpu_custom_call.1} parent=1 // pred_check
      _
    $region11: #{tpu_custom_call.1} parent=1 // pred_check_branch
      %16 = sbr.rel (0) target = $region13
    $region12: #{tpu_custom_call.1} parent=1 // pred_region
      _
    $region13: #{tpu_custom_call.1} parent=1 // pred_fallthru
      _
    // Predicated region
    $region14: #{tpu_custom_call.1} parent=1 // pred_check
      _
    $region15: #{tpu_custom_call.1} parent=1 // pred_check_branch
      %18 = sbr.rel (0) target = $region17
    $region16: #{tpu_custom_call.1} parent=1 // pred_region
      _
    $region17: #{tpu_custom_call.1} parent=1 // pred_fallthru
      _
    // Predicated region
    $region18: #{tpu_custom_call.1} parent=1 // pred_check
      _
    $region19: #{tpu_custom_call.1} parent=1 // pred_check_branch
      %20 = sbr.rel (0) target = $region21
    $region20: #{tpu_custom_call.1} parent=1 // pred_region
      _
    $region21: #{tpu_custom_call.1} parent=1 // pred_fallthru
      _
    %v21 = vld [vmem:[%s0] sm:$0xff]
    %v22 = vld [vmem:[%s0 + $0x8] sm:$0xff]
    %v23 = vld [vmem:[%s1] sm:$0xff]
    %v24 = vld [vmem:[%s1 + $0x8] sm:$0xff]
    %v25 = vld [vmem:[%s1 + $0x10] sm:$0xff]
    %v26 = vld [vmem:[%s1 + $0x18] sm:$0xff]
    %v27 = vld [vmem:[%s1 + $0x20] sm:$0xff]
    %v28 = vld [vmem:[%s1 + $0x28] sm:$0xff]
    %v29 = vld [vmem:[%s1 + $0x30] sm:$0xff]
    %v30 = vld [vmem:[%s1 + $0x38] sm:$0xff]
    %v31 = vld [vmem:[%s2] sm:$0x1]
    %v33 = vlaneseq
    %v34 = vshrl.u32 %v33, 7
    %v35 = vsub.s32 0, %v34
    %v36 = vrot.slane %v31, %v35
    %vm38 = vcmask 261120
    %v40 = vsel %vm38, %v21, 0
    %v43 = vsel %vm38, %v22, 0
    %v46 = vsel %vm38, %v23, 0
    %v49 = vsel %vm38, %v24, 0
    %v52 = vsel %vm38, %v25, 0
    %v55 = vsel %vm38, %v26, 0
    %v58 = vsel %vm38, %v27, 0
    %v61 = vsel %vm38, %v28, 0
    %v64 = vsel %vm38, %v29, 0
    %v67 = vsel %vm38, %v30, 0
    %69 = vmatprep.subr.mxu0 0.0
    %70 = vmatpush1.xpose.msra.mxu0 0.0
    %71 = vmatprep.subr.mxu0 0.0
    %72 = vmatpush1.xpose.msra.mxu0 0.0
    %73 = vmatprep.subr.mxu0 0.0
    %74 = vmatpush1.xpose.msra.mxu0 0.0
    %75 = vmatprep.subr.mxu0 0.0
    %76 = vmatpush1.xpose.msra.mxu0 0.0
    %77 = vmatprep.subr.mxu0 0.0
    %78 = vmatpush1.xpose.msra.mxu0 0.0
    %79 = vmatprep.subr.mxu0 0.0
    %80 = vmatpush1.xpose.msra.mxu0 0.0
    %81 = vmatprep.subr.mxu0 0.0
    %82 = vmatpush1.xpose.msra.mxu0 0.0
    %83 = vmatprep.subr.mxu0 0.0
    %84 = vmatpush1.xpose.msra.mxu0 0.0
    %85 = vmatprep.subr.mxu0 0.0
    %86 = vmatpush1.xpose.msra.mxu0 %v67
    %87 = vmatprep.subr.mxu0 0.0
    %88 = vmatpush1.xpose.msra.mxu0 %v64
    %89 = vmatprep.subr.mxu0 0.0
    %90 = vmatpush1.xpose.msra.mxu0 %v61
    %91 = vmatprep.subr.mxu0 0.0
    %92 = vmatpush1.xpose.msra.mxu0 %v58
    %93 = vmatprep.subr.mxu0 0.0
    %94 = vmatpush1.xpose.msra.mxu0 %v55
    %95 = vmatprep.subr.mxu0 0.0
    %96 = vmatpush1.xpose.msra.mxu0 %v52
    %97 = vmatprep.subr.mxu0 0.0
    %98 = vmatpush1.xpose.msra.mxu0 %v49
    %99 = vmatprep.subr.mxu0 0.0
    %100 = vmatpush1.xpose.msra.mxu0 %v46
    %101 = vmatprep.subr.mxu0 0.0
    %102 = vmatpush2.xpose.msra.mxu0 0.0
    %103 = vmatprep.subr.mxu0 0.0
    %104 = vmatpush2.xpose.msra.mxu0 0.0
    %105 = vmatprep.subr.mxu0 0.0
    %106 = vmatpush2.xpose.msra.mxu0 0.0
    %107 = vmatprep.subr.mxu0 0.0
    %108 = vmatpush2.xpose.msra.mxu0 0.0
    %109 = vmatprep.subr.mxu0 0.0
    %110 = vmatpush2.xpose.msra.mxu0 0.0
    %111 = vmatprep.subr.mxu0 0.0
    %112 = vmatpush2.xpose.msra.mxu0 0.0
    %113 = vmatprep.subr.mxu0 0.0
    %114 = vmatpush2.xpose.msra.mxu0 0.0
    %115 = vmatprep.subr.mxu0 0.0
    %116 = vmatpush2.xpose.msra.mxu0 0.0
    %117 = vmatprep.subr.mxu0 0.0
    %118 = vmatpush2.xpose.msra.mxu0 0.0
    %119 = vmatprep.subr.mxu0 0.0
    %120 = vmatpush2.xpose.msra.mxu0 0.0
    %121 = vmatprep.subr.mxu0 0.0
    %122 = vmatpush2.xpose.msra.mxu0 0.0
    %123 = vmatprep.subr.mxu0 0.0
    %124 = vmatpush2.xpose.msra.mxu0 0.0
    %125 = vmatprep.subr.mxu0 0.0
    %126 = vmatpush2.xpose.msra.mxu0 0.0
    %127 = vmatprep.subr.mxu0 0.0
    %128 = vmatpush2.xpose.msra.mxu0 0.0
    %129 = vmatprep.subr.mxu0 0.0
    %130 = vmatpush2.xpose.msra.mxu0 0.0
    %131 = vmatprep.subr.mxu0 0.0
    %132 = vmatpush2.xpose.msra.mxu0 0.0
    %133 = vmatprep.mubr.f32.mxu0 0.0
    %134 = vmatmul.mubr.f32.gmra.mxu0 %v40
    %v135 = vpop.f32.mrf.mxu0
    %v136 = vadd.f32 %v36, %v135
    %v137 = vpop.f32.mrf.mxu0
    %138 = vmatprep.mubr.f32.mxu0 0.0
    %139 = vmatmul.mubr.f32.gmra.mxu0 %v43
    %v140 = vpop.f32.mrf.mxu0
    %v141 = vadd.f32 %v36, %v140
    %v142 = vpop.f32.mrf.mxu0
    %143 = vdwg.mxu0
    %v144 = vmul.f32 %v136, 0.5
    %v145 = vmul.f32 %v141, 0.5
    %v146 = vmul.f32 %v136, 0.70710677
    %v147 = vmul.f32 %v141, 0.70710677
    %v148 = vand.u32 2147483647, %v146
    %v149 = vand.u32 2147483647, %v147
    %v150 = vmul.f32 %v148, 0.3275911
    %v151 = vmul.f32 %v149, 0.3275911
    %v152 = vadd.f32 %v150, 1.0
    %v153 = vadd.f32 %v151, 1.0
    %v154 = vrcp.pop %v152
    %v155 = vmul.f32 1.0, %v154
    %v156 = vrcp.pop %v153
    %v157 = vmul.f32 1.0, %v156
    %v158 = vmul.f32 %v155, 1.0614054
    %v159 = vmul.f32 %v157, 1.0614054
    %v160 = vadd.f32 %v158, -1.4531521
    %v161 = vadd.f32 %v159, -1.4531521
    %v162 = vmul.f32 %v160, %v155
    %v163 = vmul.f32 %v161, %v157
    %v164 = vadd.f32 %v162, 1.4214138
    %v165 = vadd.f32 %v163, 1.4214138
    %v166 = vmul.f32 %v164, %v155
    %v167 = vmul.f32 %v165, %v157
    %v168 = vadd.f32 %v166, -0.28449672
    %v169 = vadd.f32 %v167, -0.28449672
    %v170 = vmul.f32 %v168, %v155
    %v171 = vmul.f32 %v169, %v157
    %v172 = vadd.f32 %v170, 0.2548296
    %v173 = vadd.f32 %v171, 0.2548296
    %v174 = vmul.f32 %v172, %v155
    %v175 = vmul.f32 %v173, %v157
    %v176 = vsub.f32 0.0, %v148
    %v177 = vsub.f32 0.0, %v149
    %v178 = vmul.f32 %v176, %v148
    %v179 = vmul.f32 %v177, %v149
    %v180 = vmul.f32 %v178, 1.442695
    %v181 = vpow.pop %v180
    %v182 = vmul.f32 %v179, 1.442695
    %v183 = vpow.pop %v182
    %v184 = vmul.f32 %v174, %v181
    %v185 = vmul.f32 %v175, %v183
    %v186 = vsub.f32 1.0, %v184
    %v187 = vsub.f32 1.0, %v185
    %vm188 = vcmp.lt.f32.partialorder %v146, 0.0
    %vm189 = vcmp.lt.f32.partialorder %v147, 0.0
    %v190 = vsub.f32 0.0, %v186
    %v191 = vsub.f32 0.0, %v187
    %v192 = vsel %vm188, %v190, %v186
    %v193 = vsel %vm189, %v191, %v187
    %v194 = vadd.f32 %v192, 1.0
    %v195 = vadd.f32 %v193, 1.0
    %v196 = vmul.f32 %v144, %v194
    %v197 = vmul.f32 %v145, %v195
    %v198 = vld [vmem:[%s3] sm:$0xff]
    %v199 = vld [vmem:[%s3 + $0x8] sm:$0xff]
    %v200 = vld [vmem:[%s3 + $0x10] sm:$0xff]
    %v201 = vld [vmem:[%s3 + $0x18] sm:$0xff]
    %v202 = vld [vmem:[%s4] sm:$0x1]
    %v204 = vlaneseq
    %v205 = vshrl.u32 %v204, 7
    %v206 = vsub.s32 0, %v205
    %v207 = vrot.slane %v202, %v206
    %vm209 = vcmask 523264
    %v211 = vsel %vm209, %v196, 0
    %v214 = vsel %vm209, %v197, 0
    %v217 = vsel %vm209, %v198, 0
    %v220 = vsel %vm209, %v199, 0
    %v223 = vsel %vm209, %v200, 0
    %v226 = vsel %vm209, %v201, 0
    %228 = vmatprep.subr.mxu0 0.0
    %229 = vmatpush1.xpose.msra.mxu0 0.0
    %230 = vmatprep.subr.mxu0 0.0
    %231 = vmatpush1.xpose.msra.mxu0 0.0
    %232 = vmatprep.subr.mxu0 0.0
    %233 = vmatpush1.xpose.msra.mxu0 0.0
    %234 = vmatprep.subr.mxu0 0.0
    %235 = vmatpush1.xpose.msra.mxu0 0.0
    %236 = vmatprep.subr.mxu0 0.0
    %237 = vmatpush1.xpose.msra.mxu0 0.0
    %238 = vmatprep.subr.mxu0 0.0
    %239 = vmatpush1.xpose.msra.mxu0 0.0
    %240 = vmatprep.subr.mxu0 0.0
    %241 = vmatpush1.xpose.msra.mxu0 0.0
    %242 = vmatprep.subr.mxu0 0.0
    %243 = vmatpush1.xpose.msra.mxu0 0.0
    %244 = vmatprep.subr.mxu0 0.0
    %245 = vmatpush1.xpose.msra.mxu0 0.0
    %246 = vmatprep.subr.mxu0 0.0
    %247 = vmatpush1.xpose.msra.mxu0 0.0
    %248 = vmatprep.subr.mxu0 0.0
    %249 = vmatpush1.xpose.msra.mxu0 0.0
    %250 = vmatprep.subr.mxu0 0.0
    %251 = vmatpush1.xpose.msra.mxu0 0.0
    %252 = vmatprep.subr.mxu0 0.0
    %253 = vmatpush1.xpose.msra.mxu0 %v226
    %254 = vmatprep.subr.mxu0 0.0
    %255 = vmatpush1.xpose.msra.mxu0 %v223
    %256 = vmatprep.subr.mxu0 0.0
    %257 = vmatpush1.xpose.msra.mxu0 %v220
    %258 = vmatprep.subr.mxu0 0.0
    %259 = vmatpush1.xpose.msra.mxu0 %v217
    %260 = vmatprep.subr.mxu0 0.0
    %261 = vmatpush2.xpose.msra.mxu0 0.0
    %262 = vmatprep.subr.mxu0 0.0
    %263 = vmatpush2.xpose.msra.mxu0 0.0
    %264 = vmatprep.subr.mxu0 0.0
    %265 = vmatpush2.xpose.msra.mxu0 0.0
    %266 = vmatprep.subr.mxu0 0.0
    %267 = vmatpush2.xpose.msra.mxu0 0.0
    %268 = vmatprep.subr.mxu0 0.0
    %269 = vmatpush2.xpose.msra.mxu0 0.0
    %270 = vmatprep.subr.mxu0 0.0
    %271 = vmatpush2.xpose.msra.mxu0 0.0
    %272 = vmatprep.subr.mxu0 0.0
    %273 = vmatpush2.xpose.msra.mxu0 0.0
    %274 = vmatprep.subr.mxu0 0.0
    %275 = vmatpush2.xpose.msra.mxu0 0.0
    %276 = vmatprep.subr.mxu0 0.0
    %277 = vmatpush2.xpose.msra.mxu0 0.0
    %278 = vmatprep.subr.mxu0 0.0
    %279 = vmatpush2.xpose.msra.mxu0 0.0
    %280 = vmatprep.subr.mxu0 0.0
    %281 = vmatpush2.xpose.msra.mxu0 0.0
    %282 = vmatprep.subr.mxu0 0.0
    %283 = vmatpush2.xpose.msra.mxu0 0.0
    %284 = vmatprep.subr.mxu0 0.0
    %285 = vmatpush2.xpose.msra.mxu0 0.0
    %286 = vmatprep.subr.mxu0 0.0
    %287 = vmatpush2.xpose.msra.mxu0 0.0
    %288 = vmatprep.subr.mxu0 0.0
    %289 = vmatpush2.xpose.msra.mxu0 0.0
    %290 = vmatprep.subr.mxu0 0.0
    %291 = vmatpush2.xpose.msra.mxu0 0.0
    %292 = vmatprep.mubr.f32.mxu0 0.0
    %293 = vmatmul.mubr.f32.gmra.mxu0 %v211
    %v294 = vpop.f32.mrf.mxu0
    %v295 = vadd.f32 %v207, %v294
    %v296 = vpop.f32.mrf.mxu0
    %297 = vmatprep.mubr.f32.mxu0 0.0
    %298 = vmatmul.mubr.f32.gmra.mxu0 %v214
    %v299 = vpop.f32.mrf.mxu0
    %v300 = vadd.f32 %v207, %v299
    %v301 = vpop.f32.mrf.mxu0
    %302 = vdwg.mxu0
    %303 = vst.msk [vmem:[#allocation2] sm:$0xff] %vm38, %v295
    %304 = vst.msk [vmem:[#allocation2 + $0x8] sm:$0xff] %vm38, %v300
    // Predicated region
    $region22: #{tpu_custom_call.1} parent=1 // pred_check
      _
    $region23: #{tpu_custom_call.1} parent=1 // pred_check_branch
      %306 = sbr.rel (0) target = $region25
    $region24: #{tpu_custom_call.1} parent=1 // pred_region
      %s308 = ssub.s32 256, 256
      %309 = vsyncadd [#allocation3], %s308
      %s310 = sshll.u32 [#allocation2], 4
      %s311 = int_to_ptr.vmem [resolvable:$true] %s310
      %316 = dma.vmem_to_hbm [thread:$0]  %s311, 256, %s5, [#allocation3], 128, 128, 8
    $region25: #{tpu_custom_call.1} parent=1 // pred_fallthru
      _
    // Predicated region
    $region26: #{tpu_custom_call.1} parent=1 // pred_check
      _
    $region27: #{tpu_custom_call.1} parent=1 // pred_check_branch
      %318 = sbr.rel (0) target = $region29
    $region28: #{tpu_custom_call.1} parent=1 // pred_region
      %319 = dma.done [#allocation3], 256
    $region29: #{tpu_custom_call.1} parent=1 // pred_fallthru
      _
    %320 = vsyncpa [#allocation3], 1

</llo_original>
